<compile_context>
chip_gen: v5e
topology: v5e:2x2
jax: 0.10.0
libtpu: 0.0.40
codegen_flags: <defaults>
</compile_context>

<pallas_src>
import jax
import jax.numpy as jnp
from jax.experimental import pallas as pl
from jax.experimental.pallas import tpu as pltpu


def _round_up(x, m):
    return (x + m - 1) // m * m


def scoring_net_kernel(x_ref, w1_ref, b1_ref, w2t_ref, b2_ref, o_ref):
    # x:   (TB, D_in)   w1: (D_in, H)   b1: (1, H)
    # w2t: (1, H)       b2: SMEM (1,)   o:  (TB, 1)
    x = x_ref[...]

    # dense1 on the MXU (f32 accumulation), bias + ReLU on the VPU.
    h = jnp.dot(x, w1_ref[...], preferred_element_type=jnp.float32)
    h = jnp.maximum(h + b1_ref[...], 0.0)

    # dense2 as VPU multiply + XLU lane-reduce (avoids a degenerate N=1 MXU op).
    logits = jnp.sum(h * w2t_ref[...], axis=-1, keepdims=True)  # (TB, 1)
    logits = logits + b2_ref[0]                                 # SMEM scalar bias

    o_ref[...] = jax.nn.sigmoid(logits).astype(o_ref.dtype)


def scoring_net_forward(x, w1, b1, w2, b2, *, tile_b=16384, use_bf16_inputs=False):
    """x: (B, D_in); w1: (D_in, H); b1: (H,); w2: (H, 1); b2: (1,).

    tile_b: max batch rows per grid step (rounded to a multiple of 16).
    use_bf16_inputs: stream X / w1 as bf16 (MXU-native, f32 accumulation).
                     Changes numerics slightly; opt-in.
    """
    B, D_in = x.shape
    H = w1.shape[1]

    # Batch tile: multiple of 16 (covers f32 and bf16 sublane tiling), capped
    # at tile_b.  No padding of X: the last grid step reads/writes a ragged
    # block that Pallas bounds-checks for us.
    TB = min(_round_up(B, 16), _round_up(tile_b, 16))
    n_tiles = pl.cdiv(B, TB)

    in_dtype = jnp.bfloat16 if use_bf16_inputs else jnp.float32
    x = x.astype(in_dtype)                       # no-op for f32 inputs
    w1 = w1.astype(in_dtype)
    b1_2d = b1.reshape(1, H).astype(jnp.float32)
    w2t = w2.reshape(1, H).astype(jnp.float32)   # transposed second-layer weight
    b2_s = b2.reshape(1).astype(jnp.float32)     # scalar bias -> SMEM

    out = pl.pallas_call(
        scoring_net_kernel,
        out_shape=jax.ShapeDtypeStruct((B, 1), jnp.float32),
        grid_spec=pltpu.PrefetchScalarGridSpec(
            num_scalar_prefetch=0,
            grid=(n_tiles,),
            in_specs=[
                # X is streamed tile-by-tile (double-buffered by Pallas).
                pl.BlockSpec((TB, D_in), lambda i: (i, 0)),
                # Weights: constant block index -> resident in VMEM across steps.
                pl.BlockSpec((D_in, H), lambda i: (0, 0)),
                pl.BlockSpec((1, H), lambda i: (0, 0)),
                pl.BlockSpec((1, H), lambda i: (0, 0)),
                # b2 scalar lives in SMEM.
                pl.BlockSpec(memory_space=pltpu.MemorySpace.SMEM),
            ],
            out_specs=pl.BlockSpec((TB, 1), lambda i: (i, 0)),
        ),
        compiler_params=pltpu.CompilerParams(
            dimension_semantics=("parallel",),   # megacore-shard batch tiles (v7x)
            vmem_limit_bytes=32 * 1024 * 1024,   # room for big X tile + output block on v5e too
        ),
    )(x, w1, b1_2d, w2t, b2_s)

    return out


def init_params(key, num_inputs, num_hiddens):
    """Deterministic init mimicking PyTorch Linear default (uniform +-1/sqrt(fan_in))."""
    k1, k2, k3, k4 = jax.random.split(key, 4)
    bound1 = 1.0 / jnp.sqrt(num_inputs)
    bound2 = 1.0 / jnp.sqrt(num_hiddens)
    # stored as [in, out] (transposed relative to PyTorch's [out, in])
    w1 = jax.random.uniform(k1, (num_inputs, num_hiddens), jnp.float32,
                            minval=-bound1, maxval=bound1)
    b1 = jax.random.uniform(k2, (num_hiddens,), jnp.float32,
                            minval=-bound1, maxval=bound1)
    w2 = jax.random.uniform(k3, (num_hiddens, 1), jnp.float32,
                            minval=-bound2, maxval=bound2)
    b2 = jax.random.uniform(k4, (1,), jnp.float32,
                            minval=-bound2, maxval=bound2)
    return w1, b1, w2, b2


def _reference(x, w1, b1, w2, b2):
    h = jnp.maximum(x @ w1 + b1, 0.0)
    return jax.nn.sigmoid(h @ w2 + b2)


if __name__ == "__main__":
    num_inputs = 32
    num_hiddens = 32

    key = jax.random.PRNGKey(0)
    kx, kp, kx2 = jax.random.split(key, 3)
    w1, b1, w2, b2 = init_params(kp, num_inputs, num_hiddens)

    # 1) Small batch: single (ragged) tile, default tile size.
    batch = 8
    x = jax.random.normal(kx, (batch, num_inputs), jnp.float32)
    out = jax.block_until_ready(scoring_net_forward(x, w1, b1, w2, b2))
    ref = _reference(x, w1, b1, w2, b2)
    assert out.shape == (batch, 1)
    assert jnp.allclose(out, ref, atol=1e-5, rtol=1e-5)

    # 2) Multi-tile + ragged trailing block (exercises the no-pad streaming path).
    batch2 = 2500
    x2 = jax.random.normal(kx2, (batch2, num_inputs), jnp.float32)
    out2 = jax.block_until_ready(scoring_net_forward(x2, w1, b1, w2, b2, tile_b=1024))
    ref2 = _reference(x2, w1, b1, w2, b2)
    assert out2.shape == (batch2, 1)
    assert jnp.allclose(out2, ref2, atol=1e-5, rtol=1e-5)

    # 3) Optional bf16 input stream (looser tolerance: bf16 mantissa).
    out3 = jax.block_until_ready(
        scoring_net_forward(x2, w1, b1, w2, b2, tile_b=1024, use_bf16_inputs=True))
    assert out3.shape == (batch2, 1)
    assert jnp.allclose(out3, ref2, atol=3e-2, rtol=3e-2)

    print("KERNEL_OK")
</pallas_src>

<mosaic_0001>
module attributes {stable_mosaic.version = 11 : i64} {
  func.func @scoring_net_kernel(%arg0: i32, %arg1: memref<16x32xf32, #tpu.memory_space<vmem>>, %arg2: memref<32x32xf32, #tpu.memory_space<vmem>>, %arg3: memref<1x32xf32, #tpu.memory_space<vmem>>, %arg4: memref<1x32xf32, #tpu.memory_space<vmem>>, %arg5: memref<1xf32, #tpu.memory_space<smem>>, %arg6: memref<16x1xf32, #tpu.memory_space<vmem>>) attributes {dimension_semantics = [#tpu.dimension_semantics<parallel>], iteration_bounds = array<i64: 1>, scalar_prefetch = 0 : i64, scratch_operands = 0 : i64, tpu.core_type = #tpu.core_type<tc>, window_params = [{transform_indices = @transform_0, window_bounds = array<i64: 16, 32>}, {pipeline_mode = #tpu.pipeline_mode<synchronous>, transform_indices = @transform_1, window_bounds = array<i64: 32, 32>}, {pipeline_mode = #tpu.pipeline_mode<synchronous>, transform_indices = @transform_2, window_bounds = array<i64: 1, 32>}, {pipeline_mode = #tpu.pipeline_mode<synchronous>, transform_indices = @transform_3, window_bounds = array<i64: 1, 32>}, {transform_indices = @transform_4, window_bounds = array<i64: 1>}, {transform_indices = @transform_5, window_bounds = array<i64: 16, 1>}]} {
    %c0 = arith.constant 0 : index
    %c0_0 = arith.constant 0 : index
    %0 = vector.load %arg1[%c0, %c0_0] : memref<16x32xf32, #tpu.memory_space<vmem>>, vector<16x32xf32>
    %c0_1 = arith.constant 0 : index
    %c0_2 = arith.constant 0 : index
    %1 = vector.load %arg2[%c0_1, %c0_2] : memref<32x32xf32, #tpu.memory_space<vmem>>, vector<32x32xf32>
    %cst = arith.constant dense<0.000000e+00> : vector<16x32xf32>
    %2 = tpu.matmul %0, %1, %cst {dimension_numbers = #tpu.dot_dimension_numbers<[1], [0], [0], [1], [0, 0, 1, 1], [], []>} : vector<16x32xf32>, vector<32x32xf32>, vector<16x32xf32> -> vector<16x32xf32>
    %c0_3 = arith.constant 0 : index
    %c0_4 = arith.constant 0 : index
    %3 = vector.load %arg3[%c0_3, %c0_4] : memref<1x32xf32, #tpu.memory_space<vmem>>, vector<1x32xf32>
    %4 = vector.broadcast %3 : vector<1x32xf32> to vector<16x32xf32>
    %5 = arith.addf %2, %4 : vector<16x32xf32>
    %cst_5 = arith.constant 0.000000e+00 : f32
    %6 = vector.broadcast %cst_5 : f32 to vector<16x32xf32>
    %7 = arith.maximumf %5, %6 : vector<16x32xf32>
    %c0_6 = arith.constant 0 : index
    %c0_7 = arith.constant 0 : index
    %8 = vector.load %arg4[%c0_6, %c0_7] : memref<1x32xf32, #tpu.memory_space<vmem>>, vector<1x32xf32>
    %9 = vector.broadcast %8 : vector<1x32xf32> to vector<16x32xf32>
    %10 = arith.mulf %7, %9 : vector<16x32xf32>
    %cst_8 = arith.constant dense<0.000000e+00> : vector<16xf32>
    %11 = vector.multi_reduction <add>, %10, %cst_8 [1] : vector<16x32xf32> to vector<16xf32>
    %12 = vector.shape_cast %11 : vector<16xf32> to vector<16x1xf32>
    %c0_9 = arith.constant 0 : index
    %13 = memref.load %arg5[%c0_9] : memref<1xf32, #tpu.memory_space<smem>>
    %14 = vector.broadcast %13 : f32 to vector<16x1xf32>
    %15 = arith.addf %12, %14 : vector<16x1xf32>
    %16 = arith.negf %15 : vector<16x1xf32>
    %17 = math.exp %16 : vector<16x1xf32>
    %cst_10 = arith.constant 1.000000e+00 : f32
    %18 = vector.broadcast %cst_10 : f32 to vector<16x1xf32>
    %19 = arith.addf %18, %17 : vector<16x1xf32>
    %20 = arith.divf %18, %19 : vector<16x1xf32>
    %c0_11 = arith.constant 0 : index
    %c0_12 = arith.constant 0 : index
    %21 = vector.load %arg6[%c0_11, %c0_12] : memref<16x1xf32, #tpu.memory_space<vmem>>, vector<16x1xf32>
    tpu.vector_store %arg6[%c0_11, %c0_12], %20 {strides = array<i32>} : memref<16x1xf32, #tpu.memory_space<vmem>>, vector<16x1xf32>,
    return
  }
  func.func @transform_0(%arg0: i32) -> (i32, i32) {
    %c0_i32 = arith.constant 0 : i32
    %c0_i32_0 = arith.constant 0 : i32
    return %arg0, %c0_i32 : i32, i32
  }
  func.func @transform_1(%arg0: i32) -> (i32, i32) {
    %c0_i32 = arith.constant 0 : i32
    %c0_i32_0 = arith.constant 0 : i32
    %c0_i32_1 = arith.constant 0 : i32
    return %c0_i32, %c0_i32_0 : i32, i32
  }
  func.func @transform_2(%arg0: i32) -> (i32, i32) {
    %c0_i32 = arith.constant 0 : i32
    %c0_i32_0 = arith.constant 0 : i32
    %c0_i32_1 = arith.constant 0 : i32
    return %c0_i32, %c0_i32_0 : i32, i32
  }
  func.func @transform_3(%arg0: i32) -> (i32, i32) {
    %c0_i32 = arith.constant 0 : i32
    %c0_i32_0 = arith.constant 0 : i32
    %c0_i32_1 = arith.constant 0 : i32
    return %c0_i32, %c0_i32_0 : i32, i32
  }
  func.func @transform_4(%arg0: i32) -> i32 {
    %c0_i32 = arith.constant 0 : i32
    %c0_i32_0 = arith.constant 0 : i32
    return %c0_i32 : i32
  }
  func.func @transform_5(%arg0: i32) -> (i32, i32) {
    %c0_i32 = arith.constant 0 : i32
    %c0_i32_0 = arith.constant 0 : i32
    return %arg0, %c0_i32 : i32, i32
  }
}

</mosaic_0001>

<llo_original>
// kernel: tpu_custom_call.1
$region0: #{tpu_custom_call.1}
  #allocation0 [shape = 'u32[]', space=smem, size = 0x4, offset = 0x4, fixed_abs, tag = 'smem constant byte address 0x4 - core index']
  #allocation1 [shape = 'u32[72,128]{1,0:T(1,128)}', space=vmem, size = 0x9000, scoped, tag = 'internal scratch']
  #allocation2 [shape = 'f32[1]{0:T(128)S(6)}', space=smem, size = 0x200, scoped, tag = 'scoped memory for tpu_custom_call.1']
  %s0 = inlined_call_operand.hbm [shape: f32[8,32], index: 0, kind: input, shape index: {}]
  %s1 = inlined_call_operand.hbm [shape: f32[32,32], index: 1, kind: input, shape index: {}]
  %s2 = inlined_call_operand.vmem [shape: f32[1,32], index: 2, kind: input, shape index: {}]
  %s3 = inlined_call_operand.vmem [shape: f32[1,32], index: 3, kind: input, shape index: {}]
  %s4 = inlined_call_operand.<no memory space> [shape: f32[1], index: 4, kind: input, shape index: {}]
  %s5 = inlined_call_operand.vmem [shape: f32[8,1], index: 5, kind: output, shape index: {}]
  %s6 = sld [smem:[#allocation0]]
  $region72: #{tpu_custom_call.1} parent=0
    _
  %s8 = ssub.s32 1, %s6
  %s9 = scalar_select 0, %s8, %s6
  %10 = sst [smem:[#allocation2]] %s4
  $region1: #{tpu_custom_call.1} parent=0
    #allocation3 [shape = 'u8[8192]{0}', space=vmem, size = 0x2000, scoped, tag = 'input window, operand 0, single buffered']
    #allocation4 [shape = 's32[1]{0}', space=sflag, size = 0x4, scoped, tag = 'scoped memory for tpu_custom_call.1']
    #allocation5 [shape = 'u8[16384]{0}', space=vmem, size = 0x4000, scoped, tag = 'input window, operand 1, single buffered']
    #allocation6 [shape = 's32[1]{0}', space=sflag, size = 0x4, scoped, tag = 'scoped memory for tpu_custom_call.1']
    #allocation7 [shape = 'u8[8192]{0}', space=vmem, size = 0x2000, scoped, tag = 'output window, operand 0, single buffered']
    %11 = vsyncpa [#allocation4], 0
    %12 = vsyncpa [#allocation6], 0
    // Predicated region
    $region2: #{tpu_custom_call.1} parent=1 // pred_check
      _
    $region3: #{tpu_custom_call.1} parent=1 // pred_check_branch
      %14 = sbr.rel (0) target = $region5
    $region4: #{tpu_custom_call.1} parent=1 // pred_region
      %16 = vsyncadd [#allocation4], 128
      %s17 = sshll.u32 %s0, 4
      %s18 = int_to_ptr.hbm [resolvable:$true] %s17
      %s19 = sshll.u32 [#allocation3], 4
      %s20 = int_to_ptr.vmem [resolvable:$true] %s19
      %25 = dma.hbm_to_vmem [thread:$0]  %s18, 128, %s20, [#allocation4], 128, 128, 8
    $region5: #{tpu_custom_call.1} parent=1 // pred_fallthru
      _
    // Predicated region
    $region6: #{tpu_custom_call.1} parent=1 // pred_check
      _
    $region7: #{tpu_custom_call.1} parent=1 // pred_check_branch
      %27 = sbr.rel (0) target = $region9
    $region8: #{tpu_custom_call.1} parent=1 // pred_region
      %29 = vsyncadd [#allocation6], 0
      %s30 = sshll.u32 %s1, 4
      %s31 = int_to_ptr.hbm [resolvable:$true] %s30
      %s32 = sshll.u32 [#allocation5], 4
      %s33 = int_to_ptr.vmem [resolvable:$true] %s32
      %38 = dma.hbm_to_vmem [thread:$0]  %s31, 512, %s33, [#allocation6], 128, 128, 8
    $region9: #{tpu_custom_call.1} parent=1 // pred_fallthru
      _
    // Predicated region
    $region10: #{tpu_custom_call.1} parent=1 // pred_check
      _
    $region11: #{tpu_custom_call.1} parent=1 // pred_check_branch
      %40 = sbr.rel (0) target = $region13
    $region12: #{tpu_custom_call.1} parent=1 // pred_region
      _
    $region13: #{tpu_custom_call.1} parent=1 // pred_fallthru
      _
    // Predicated region
    $region14: #{tpu_custom_call.1} parent=1 // pred_check
      _
    $region15: #{tpu_custom_call.1} parent=1 // pred_check_branch
      %42 = sbr.rel (0) target = $region17
    $region16: #{tpu_custom_call.1} parent=1 // pred_region
      _
    $region17: #{tpu_custom_call.1} parent=1 // pred_fallthru
      _
    // Predicated region
    $region18: #{tpu_custom_call.1} parent=1 // pred_check
      _
    $region19: #{tpu_custom_call.1} parent=1 // pred_check_branch
      %44 = sbr.rel (0) target = $region21
    $region20: #{tpu_custom_call.1} parent=1 // pred_region
      _
    $region21: #{tpu_custom_call.1} parent=1 // pred_fallthru
      _
    // Predicated region
    $region22: #{tpu_custom_call.1} parent=1 // pred_check
      _
    $region23: #{tpu_custom_call.1} parent=1 // pred_check_branch
      %46 = sbr.rel (0) target = $region25
    $region24: #{tpu_custom_call.1} parent=1 // pred_region
      %48 = dma.done [#allocation4], 256
    $region25: #{tpu_custom_call.1} parent=1 // pred_fallthru
      _
    // Predicated region
    $region26: #{tpu_custom_call.1} parent=1 // pred_check
      _
    $region27: #{tpu_custom_call.1} parent=1 // pred_check_branch
      %50 = sbr.rel (0) target = $region29
    $region28: #{tpu_custom_call.1} parent=1 // pred_region
      %52 = dma.done [#allocation6], 512
    $region29: #{tpu_custom_call.1} parent=1 // pred_fallthru
      _
    %v53 = vld [vmem:[#allocation3] sm:$0xff]
    %v54 = vld [vmem:[#allocation3 + $0x8] sm:$0xff]
    %v55 = vld [vmem:[#allocation5] sm:$0xff]
    %v56 = vld [vmem:[#allocation5 + $0x8] sm:$0xff]
    %v57 = vld [vmem:[#allocation5 + $0x10] sm:$0xff]
    %v58 = vld [vmem:[#allocation5 + $0x18] sm:$0xff]
    %v59 = vld [vmem:[%s2] sm:$0x1]
    %v61 = vperm.slane %v59, 0
    %vm63 = vcmask 261120
    %v65 = vsel %vm63, %v53, 0
    %v68 = vsel %vm63, %v54, 0
    %70 = vmatpush.msra.mxu0 0.0
    %71 = vmatpush.msra.mxu0 0.0
    %72 = vmatpush.msra.mxu0 0.0
    %73 = vmatpush.msra.mxu0 0.0
    %74 = vmatpush.msra.mxu0 0.0
    %75 = vmatpush.msra.mxu0 0.0
    %76 = vmatpush.msra.mxu0 0.0
    %77 = vmatpush.msra.mxu0 0.0
    %78 = vmatpush.msra.mxu0 0.0
    %79 = vmatpush.msra.mxu0 0.0
    %80 = vmatpush.msra.mxu0 0.0
    %81 = vmatpush.msra.mxu0 0.0
    %82 = vmatpush.msra.mxu0 %v58
    %83 = vmatpush.msra.mxu0 %v57
    %84 = vmatpush.msra.mxu0 %v56
    %85 = vmatpush.msra.mxu0 %v55
    %86 = vmatmul.f32.gmra.mxu0 %v65
    %v87 = vpop.f32.mrf.mxu0
    %v88 = vadd.f32 %v61, %v87
    %89 = vmatmul.f32.gmra.mxu0 %v68
    %v90 = vpop.f32.mrf.mxu0
    %v91 = vadd.f32 %v61, %v90
    %92 = vdwg.mxu0
    %v93 = vmax.f32 %v88, 0.0
    %v94 = vmax.f32 %v91, 0.0
    %v95 = vld [vmem:[%s3] sm:$0x1]
    %v97 = vperm.slane %v95, 0
    %v99 = vmul.f32 %v93, %v97
    %v100 = vmul.f32 %v94, %v97
    %v101 = vsel %vm63, %v99, 0.0
    %102 = vadd.xlane.f32.xlu0 %v101
    %v103 = vpop.xlane.xlu0 %102
    %v104 = vsel %vm63, %v100, 0.0
    %105 = vadd.xlane.f32.xlu0 %v104
    %v106 = vpop.xlane.xlu0 %105
    %s107 = sld [smem:[#allocation2]]
    %v108 = vstv %s107
    %v109 = vadd.f32 %v103, %v108
    %v110 = vadd.f32 %v106, %v108
    %v111 = vxor.u32 %v109, 2147483648
    %v112 = vxor.u32 %v110, 2147483648
    %v113 = vmul.f32 %v111, 1.442695
    %v114 = vpow.pop %v113
    %v115 = vmul.f32 %v112, 1.442695
    %v116 = vpow.pop %v115
    %v117 = vadd.f32 %v114, 1.0
    %v118 = vadd.f32 %v116, 1.0
    %v119 = vrcp.pop %v117
    %v120 = vmul.f32 %v117, %v119
    %v121 = vsub.f32 1.0, %v120
    %v122 = vmul.f32 %v119, %v121
    %v123 = vadd.f32 %v119, %v122
    %vm124 = vweird.f32 %v117
    %vm125 = vweird.f32 %v119
    %vm126 = vmor %vm124, %vm125
    %v127 = vsel %vm126, %v119, %v123
    %v128 = vand.u32 2147483647, %v117
    %vm129 = vcmp.eq.f32.partialorder %v128, 8.507059e+37
    %v130 = vand.u32 %v117, 2147483648
    %v131 = vor.u32 1.1754944e-38, %v130
    %v132 = vsel %vm129, %v131, %v127
    %v133 = vmul.f32 1.0, %v132
    %v134 = vrcp.pop %v118
    %v135 = vmul.f32 %v118, %v134
    %v136 = vsub.f32 1.0, %v135
    %v137 = vmul.f32 %v134, %v136
    %v138 = vadd.f32 %v134, %v137
    %vm139 = vweird.f32 %v118
    %vm140 = vweird.f32 %v134
    %vm141 = vmor %vm139, %vm140
    %v142 = vsel %vm141, %v134, %v138
    %v143 = vand.u32 2147483647, %v118
    %vm144 = vcmp.eq.f32.partialorder %v143, 8.507059e+37
    %v145 = vand.u32 %v118, 2147483648
    %v146 = vor.u32 1.1754944e-38, %v145
    %v147 = vsel %vm144, %v146, %v142
    %v148 = vmul.f32 1.0, %v147
    %vm149 = vcmask 7168
    %150 = vst.msk [vmem:[#allocation7] sm:$0xff] %vm149, %v133
    %151 = vst.msk [vmem:[#allocation7 + $0x8] sm:$0xff] %vm149, %v148
    // Predicated region
    $region30: #{tpu_custom_call.1} parent=1 // pred_check
      _
    $region31: #{tpu_custom_call.1} parent=1 // pred_check_branch
      %153 = sbr.rel (0) target = $region33
    $region32: #{tpu_custom_call.1} parent=1 // pred_region
      // Predicated region
      $region34: #{tpu_custom_call.1} parent=32 // pred_check
        _
      $region35: #{tpu_custom_call.1} parent=32 // pred_check_branch
        %155 = sbr.rel (0) target = $region37
      $region36: #{tpu_custom_call.1} parent=32 // pred_region
        // Predicated region
        $region38: #{tpu_custom_call.1} parent=36 // pred_check
          _
        $region39: #{tpu_custom_call.1} parent=36 // pred_check_branch
          %157 = sbr.rel (0) target = $region41
        $region40: #{tpu_custom_call.1} parent=36 // pred_region
          // Predicated region
          $region53: #{tpu_custom_call.1} parent=40 // pred_check
            _
          $region54: #{tpu_custom_call.1} parent=40 // pred_check_branch
            %173 = sbr.rel (0) target = $region56
          $region55: #{tpu_custom_call.1} parent=40 // pred_region
            loop: start=0, step=1, limit=1
            $region57: #{tpu_custom_call.1} parent=55 // loop_pre_header
              _
            $region58: #{tpu_custom_call.1} parent=55 // loop_header
              %s175 = sphi 0, %s179
              %p176 = scmp.ge.s32.totalorder %s175, 1
              %s180 = sphi [#allocation7], [#allocation7]
              %s181 = sphi %s5, %s5
            $region59: #{tpu_custom_call.1} parent=55 // loop_header_branch
              %178 = sbr.rel (%p176) target = $region63
            $region60: #{tpu_custom_call.1} parent=55 // loop_body
              %v182 = vld [vmem:[%s180] sm:$0xff]
              %183 = vst [vmem:[%s181] sm:$0xff] %v182
            $region61: #{tpu_custom_call.1} parent=55 // loop_footer
              %s179 = sadd.s32 1, %s175
            $region62: #{tpu_custom_call.1} parent=55 // loop_footer_branch
              %174 = sbr.rel target = $region58
            $region63: #{tpu_custom_call.1} parent=55 // loop_exit
              _
          $region56: #{tpu_custom_call.1} parent=40 // pred_fallthru
            _
          // Predicated region
          $region64: #{tpu_custom_call.1} parent=40 // pred_check
            _
          $region65: #{tpu_custom_call.1} parent=40 // pred_check_branch
            %185 = sbr.rel target = $region67
          $region66: #{tpu_custom_call.1} parent=40 // pred_region
            _
          $region67: #{tpu_custom_call.1} parent=40 // pred_fallthru
            _
        $region41: #{tpu_custom_call.1} parent=36 // pred_fallthru
          _
        // Predicated region
        $region42: #{tpu_custom_call.1} parent=36 // pred_check
          _
        $region43: #{tpu_custom_call.1} parent=36 // pred_check_branch
          %159 = sbr.rel target = $region45
        $region44: #{tpu_custom_call.1} parent=36 // pred_region
          %s161 = ssub.s32 256, 1
          loop: start=0, step=1, limit=1
          $region46: #{tpu_custom_call.1} parent=44 // loop_pre_header
            _
          $region47: #{tpu_custom_call.1} parent=44 // loop_header
            %s163 = sphi 0, %s167
            %p164 = scmp.ge.s32.totalorder %s163, 1
            %s168 = sphi [#allocation7], [#allocation7]
            %s169 = sphi %s5, %s5
          $region48: #{tpu_custom_call.1} parent=44 // loop_header_branch
            %166 = sbr.rel (%p164) target = $region52
          $region49: #{tpu_custom_call.1} parent=44 // loop_body
            %v170 = vld [vmem:[%s168] sm:%s161]
            %171 = vst [vmem:[%s169] sm:%s161] %v170
          $region50: #{tpu_custom_call.1} parent=44 // loop_footer
            %s167 = sadd.s32 1, %s163
          $region51: #{tpu_custom_call.1} parent=44 // loop_footer_branch
            %162 = sbr.rel target = $region47
          $region52: #{tpu_custom_call.1} parent=44 // loop_exit
            _
        $region45: #{tpu_custom_call.1} parent=36 // pred_fallthru
          _
      $region37: #{tpu_custom_call.1} parent=32 // pred_fallthru
        _
      %186 = vnop
    $region33: #{tpu_custom_call.1} parent=1 // pred_fallthru
      _
    // Predicated region
    $region68: #{tpu_custom_call.1} parent=1 // pred_check
      _
    $region69: #{tpu_custom_call.1} parent=1 // pred_check_branch
      %188 = sbr.rel (0) target = $region71
    $region70: #{tpu_custom_call.1} parent=1 // pred_region
      _
    $region71: #{tpu_custom_call.1} parent=1 // pred_fallthru
      _
    %189 = vsyncpa [#allocation4], 1
    %190 = vsyncpa [#allocation6], 1

</llo_original>
